<compile_context>
chip_gen: v7x
topology: tpu7x:2x2x1
jax: 0.10.0
libtpu: 0.0.40
codegen_flags: <defaults>
</compile_context>

<pallas_src>
import functools

import jax
import jax.numpy as jnp
from jax.experimental import pallas as pl
from jax.experimental.pallas import tpu as pltpu

EPS = 1e-5
LANE = 128


def _round_up(v, m):
    return (v + m - 1) // m * m


def _bd_kernel(x_ref, w1_ref, g1_ref, be1_ref, w2_ref, g2_ref, be2_ref,
               o_ref,
               z1_ref, z2_ref, s1_ref, q1_ref, s2_ref, q2_ref,
               *, n_total):
    phase = pl.program_id(0)
    n = pl.program_id(1)
    inv_n = 1.0 / float(n_total)

    # ---------------- phase 0: layer-1 matmul + BN1 statistics ----------------
    @pl.when(phase == 0)
    def _phase0():
        @pl.when(n == 0)
        def _init():
            s1_ref[...] = jnp.zeros_like(s1_ref)
            q1_ref[...] = jnp.zeros_like(q1_ref)

        z1 = jnp.dot(x_ref[...], w1_ref[...],
                     preferred_element_type=jnp.float32)
        z1_ref[n] = z1
        # Per-feature sum / sum-of-squares: one sweep over z1.
        # TODO(synk): for very large batch tiles route these reductions through
        # the MXU (ones(1,TN) @ z1) to move them off the XLU.
        s1_ref[...] += jnp.sum(z1, axis=0, keepdims=True)
        q1_ref[...] += jnp.sum(z1 * z1, axis=0, keepdims=True)

    # --------- phase 1: BN1 + ReLU + layer-2 matmul + BN2 statistics ----------
    @pl.when(phase == 1)
    def _phase1():
        @pl.when(n == 0)
        def _finalize_bn1():
            mean = s1_ref[...] * inv_n
            # E[x^2] - E[x]^2 in f32; fine for near-zero-mean post-linear
            # activations (review note: revisit for large-mean inputs).
            var = q1_ref[...] * inv_n - mean * mean
            scale = g1_ref[...] * jax.lax.rsqrt(var + EPS)
            s1_ref[...] = scale                       # reuse as BN1 scale
            q1_ref[...] = be1_ref[...] - mean * scale  # reuse as BN1 shift
            s2_ref[...] = jnp.zeros_like(s2_ref)
            q2_ref[...] = jnp.zeros_like(q2_ref)

        a1 = jnp.maximum(z1_ref[n] * s1_ref[...] + q1_ref[...], 0.0)
        z2 = jnp.dot(a1.astype(jnp.bfloat16), w2_ref[...],
                     preferred_element_type=jnp.float32)
        z2_ref[n] = z2
        s2_ref[...] += jnp.sum(z2, axis=0, keepdims=True)
        q2_ref[...] += jnp.sum(z2 * z2, axis=0, keepdims=True)

    # ---------------------- phase 2: BN2 + ReLU -> output ---------------------
    @pl.when(phase == 2)
    def _phase2():
        @pl.when(n == 0)
        def _finalize_bn2():
            mean = s2_ref[...] * inv_n
            var = q2_ref[...] * inv_n - mean * mean
            scale = g2_ref[...] * jax.lax.rsqrt(var + EPS)
            s2_ref[...] = scale
            q2_ref[...] = be2_ref[...] - mean * scale

        y = jnp.maximum(z2_ref[n] * s2_ref[...] + q2_ref[...], 0.0)
        o_ref[...] = y.astype(o_ref.dtype)


def prepare_params(w1, b1, g1, be1, w2, b2, g2, be2):
    """PyTorch-layout params -> padded, kernel-ready arrays.

    w1: (H, D_in), w2: (D_out, H) as in nn.Linear.  The linear biases b1/b2 are
    dropped: a bias immediately followed by training-mode BatchNorm1d is exactly
    cancelled by the mean subtraction.
    """
    del b1, b2  # exactly cancelled by the following BatchNorm (training mode)
    h, d_in = w1.shape
    d_out = w2.shape[0]
    h_pad = _round_up(h, LANE)
    d_out_pad = _round_up(d_out, LANE)

    def pad_to(a, shape):
        out = jnp.zeros(shape, a.dtype)
        return out.at[tuple(slice(0, s) for s in a.shape)].set(a)

    params = {
        "w1": pad_to(w1.T, (d_in, h_pad)).astype(jnp.bfloat16),
        "g1": pad_to(g1.reshape(1, -1), (1, h_pad)).astype(jnp.float32),
        "be1": pad_to(be1.reshape(1, -1), (1, h_pad)).astype(jnp.float32),
        "w2": pad_to(w2.T, (h_pad, d_out_pad)).astype(jnp.bfloat16),
        "g2": pad_to(g2.reshape(1, -1), (1, d_out_pad)).astype(jnp.float32),
        "be2": pad_to(be2.reshape(1, -1), (1, d_out_pad)).astype(jnp.float32),
    }
    return params, d_out


def batch_discriminator(x, params, d_out, *, max_tile_n=512):
    """x: (N, D_in) f32.  Returns (N, D_out) f32."""
    n, d_in = x.shape
    h_pad = params["w1"].shape[1]
    d_out_pad = params["w2"].shape[1]

    # Batch tile: BN statistics must cover exactly N rows, so pick a tile that
    # divides N.  TODO(synk): masked partial tiles for N with no nice divisor.
    tn = n
    if n > max_tile_n:
        for cand in (c for c in (512, 256, 128, 64, 32, 16, 8) if c <= max_tile_n):
            if n % cand == 0:
                tn = cand
                break
    nt = n // tn

    x_bf16 = x.astype(jnp.bfloat16)

    const = lambda p, i: (0, 0)
    # Only stream x during phase 0 / write y during phase 2; otherwise the
    # index stays at block 0 so no redundant HBM traffic is issued.
    x_map = lambda p, i: (jnp.where(p == 0, i, 0), 0)
    o_map = lambda p, i: (jnp.where(p == 2, i, 0), 0)

    in_specs = [
        pl.BlockSpec((tn, d_in), x_map),
        pl.BlockSpec(params["w1"].shape, const),
        pl.BlockSpec(params["g1"].shape, const),
        pl.BlockSpec(params["be1"].shape, const),
        pl.BlockSpec(params["w2"].shape, const),
        pl.BlockSpec(params["g2"].shape, const),
        pl.BlockSpec(params["be2"].shape, const),
    ]
    out_spec = pl.BlockSpec((tn, d_out_pad), o_map)

    scratch = [
        pltpu.VMEM((nt, tn, h_pad), jnp.float32),      # z1 (resident pre-BN1)
        pltpu.VMEM((nt, tn, d_out_pad), jnp.float32),  # z2 (resident pre-BN2)
        pltpu.VMEM((1, h_pad), jnp.float32),           # BN1 sum   -> scale
        pltpu.VMEM((1, h_pad), jnp.float32),           # BN1 sumsq -> shift
        pltpu.VMEM((1, d_out_pad), jnp.float32),       # BN2 sum   -> scale
        pltpu.VMEM((1, d_out_pad), jnp.float32),       # BN2 sumsq -> shift
    ]

    # Explicit VMEM budget: resident activations + double-buffered x/out tiles
    # + resident weights, with headroom.
    resident = 4 * nt * tn * (h_pad + d_out_pad)
    tiles = 2 * tn * (2 * d_in + 4 * d_out_pad)
    weights = 2 * (d_in * h_pad + h_pad * d_out_pad) + 16 * (h_pad + d_out_pad)
    vmem_bytes = min(int(1.5 * (resident + tiles + weights)) + (8 << 20), 112 << 20)
    # TODO(synk): once N is large enough that the resident z1/z2 scratch no
    # longer fits VMEM (esp. v7x's 64 MiB), switch to a fully streamed
    # recompute/two-pass stats variant.

    kernel = functools.partial(_bd_kernel, n_total=n)

    out = pl.pallas_call(
        kernel,
        out_shape=jax.ShapeDtypeStruct((n, d_out_pad), jnp.float32),
        grid_spec=pltpu.PrefetchScalarGridSpec(
            num_scalar_prefetch=0,
            grid=(3, nt),
            in_specs=in_specs,
            out_specs=out_spec,
            scratch_shapes=scratch,
        ),
        compiler_params=pltpu.CompilerParams(
            dimension_semantics=("arbitrary", "arbitrary"),
            vmem_limit_bytes=vmem_bytes,
        ),
    )(x_bf16, params["w1"], params["g1"], params["be1"],
      params["w2"], params["g2"], params["be2"])

    return out[:, :d_out]


# ----------------------------- references ------------------------------------
def reference_f32(x, w1, b1, g1, be1, w2, b2, g2, be2):
    """Pure-f32 replica of the PyTorch module (training-mode BatchNorm1d)."""
    def bn(h, g, b):
        m = jnp.mean(h, axis=0, keepdims=True)
        v = jnp.mean((h - m) ** 2, axis=0, keepdims=True)
        return (h - m) / jnp.sqrt(v + EPS) * g + b

    h = x @ w1.T + b1
    h = jnp.maximum(bn(h, g1, be1), 0.0)
    h = h @ w2.T + b2
    return jnp.maximum(bn(h, g2, be2), 0.0)


def reference_mixed(x, w1, g1, be1, w2, g2, be2):
    """Mimics the kernel's precision (bf16 matmuls, f32 BN, biases dropped)."""
    def bn(h, g, b):
        m = jnp.mean(h, axis=0, keepdims=True)
        v = jnp.mean(h * h, axis=0, keepdims=True) - m * m
        scale = g * jax.lax.rsqrt(v + EPS)
        return h * scale + (b - m * scale)

    z1 = jnp.dot(x.astype(jnp.bfloat16), w1.T.astype(jnp.bfloat16),
                 preferred_element_type=jnp.float32)
    a1 = jnp.maximum(bn(z1, g1, be1), 0.0)
    z2 = jnp.dot(a1.astype(jnp.bfloat16), w2.T.astype(jnp.bfloat16),
                 preferred_element_type=jnp.float32)
    return jnp.maximum(bn(z2, g2, be2), 0.0)


# -------------------------------- demo ---------------------------------------
if __name__ == "__main__":
    def run_case(key, n, d_in, h, d_out, max_tile_n=512):
        ks = jax.random.split(key, 9)
        x = jax.random.normal(ks[0], (n, d_in), jnp.float32)
        w1 = jax.random.normal(ks[1], (h, d_in), jnp.float32) * 0.1
        b1 = jax.random.normal(ks[2], (h,), jnp.float32) * 0.1
        g1 = 1.0 + 0.1 * jax.random.normal(ks[3], (h,), jnp.float32)
        be1 = 0.1 * jax.random.normal(ks[4], (h,), jnp.float32)
        w2 = jax.random.normal(ks[5], (d_out, h), jnp.float32) * 0.1
        b2 = jax.random.normal(ks[6], (d_out,), jnp.float32) * 0.1
        g2 = 1.0 + 0.1 * jax.random.normal(ks[7], (d_out,), jnp.float32)
        be2 = 0.1 * jax.random.normal(ks[8], (d_out,), jnp.float32)

        params, d_out_real = prepare_params(w1, b1, g1, be1, w2, b2, g2, be2)
        out = jax.block_until_ready(
            batch_discriminator(x, params, d_out_real, max_tile_n=max_tile_n))

        ref32 = reference_f32(x, w1, b1, g1, be1, w2, b2, g2, be2)
        assert out.shape == ref32.shape, f"shape mismatch (n={n})"
        # loose check vs full-f32 reference (bf16 matmul operands in the kernel)
        assert jnp.allclose(out, ref32, atol=7e-2, rtol=7e-2), \
            f"mismatch vs f32 reference (n={n})"
        # tight check vs a precision-matched reference (also proves the dropped
        # biases are exactly cancelled by training-mode BN)
        refmx = reference_mixed(x, w1, g1, be1, w2, g2, be2)
        assert jnp.allclose(out, refmx, atol=2e-3, rtol=2e-3), \
            f"mismatch vs mixed-precision reference (n={n})"

    key = jax.random.PRNGKey(0)
    # small shapes implied by the module: layer_dim = [32, 64, 16]
    run_case(jax.random.fold_in(key, 0), n=8, d_in=32, h=64, d_out=16)
    # larger batch exercising the (3 phases x 4 N-tiles) grid path
    run_case(jax.random.fold_in(key, 1), n=1024, d_in=32, h=64, d_out=16,
             max_tile_n=256)

    print("KERNEL_OK")
</pallas_src>

<mosaic_0001>
module attributes {stable_mosaic.version = 11 : i64} {
  func.func @_bd_kernel(%arg0: i32, %arg1: i32, %arg2: memref<8x32xbf16, #tpu.memory_space<vmem>>, %arg3: memref<32x128xbf16, #tpu.memory_space<vmem>>, %arg4: memref<1x128xf32, #tpu.memory_space<vmem>>, %arg5: memref<1x128xf32, #tpu.memory_space<vmem>>, %arg6: memref<128x128xbf16, #tpu.memory_space<vmem>>, %arg7: memref<1x128xf32, #tpu.memory_space<vmem>>, %arg8: memref<1x128xf32, #tpu.memory_space<vmem>>, %arg9: memref<8x128xf32, #tpu.memory_space<vmem>>, %arg10: memref<1x8x128xf32, #tpu.memory_space<vmem>>, %arg11: memref<1x8x128xf32, #tpu.memory_space<vmem>>, %arg12: memref<1x128xf32, #tpu.memory_space<vmem>>, %arg13: memref<1x128xf32, #tpu.memory_space<vmem>>, %arg14: memref<1x128xf32, #tpu.memory_space<vmem>>, %arg15: memref<1x128xf32, #tpu.memory_space<vmem>>) attributes {dimension_semantics = [#tpu.dimension_semantics<arbitrary>, #tpu.dimension_semantics<arbitrary>], iteration_bounds = array<i64: 3, 1>, scalar_prefetch = 0 : i64, scratch_operands = 6 : i64, tpu.core_type = #tpu.core_type<tc>, window_params = [{transform_indices = @transform_0, window_bounds = array<i64: 8, 32>}, {pipeline_mode = #tpu.pipeline_mode<synchronous>, transform_indices = @transform_1, window_bounds = array<i64: 32, 128>}, {pipeline_mode = #tpu.pipeline_mode<synchronous>, transform_indices = @transform_2, window_bounds = array<i64: 1, 128>}, {pipeline_mode = #tpu.pipeline_mode<synchronous>, transform_indices = @transform_3, window_bounds = array<i64: 1, 128>}, {pipeline_mode = #tpu.pipeline_mode<synchronous>, transform_indices = @transform_4, window_bounds = array<i64: 128, 128>}, {pipeline_mode = #tpu.pipeline_mode<synchronous>, transform_indices = @transform_5, window_bounds = array<i64: 1, 128>}, {pipeline_mode = #tpu.pipeline_mode<synchronous>, transform_indices = @transform_6, window_bounds = array<i64: 1, 128>}, {transform_indices = @transform_7, window_bounds = array<i64: 8, 128>}]} {
    %c0_i32 = arith.constant 0 : i32
    %0 = arith.cmpi eq, %arg0, %c0_i32 : i32
    %1 = arith.extui %0 : i1 to i32
    %c0_i32_0 = arith.constant 0 : i32
    %2 = arith.cmpi ne, %1, %c0_i32_0 : i32
    scf.if %2 {
      %c0_i32_3 = arith.constant 0 : i32
      %9 = arith.cmpi eq, %arg1, %c0_i32_3 : i32
      %10 = arith.extui %9 : i1 to i32
      %c0_i32_4 = arith.constant 0 : i32
      %11 = arith.cmpi ne, %10, %c0_i32_4 : i32
      scf.if %11 {
        %cst_20 = arith.constant 0.000000e+00 : f32
        %30 = vector.broadcast %cst_20 : f32 to vector<1x128xf32>
        %c0_21 = arith.constant 0 : index
        %c0_22 = arith.constant 0 : index
        %31 = vector.load %arg12[%c0_21, %c0_22] : memref<1x128xf32, #tpu.memory_space<vmem>>, vector<1x128xf32>
        tpu.vector_store %arg12[%c0_21, %c0_22], %30 {strides = array<i32>} : memref<1x128xf32, #tpu.memory_space<vmem>>, vector<1x128xf32>,
        %cst_23 = arith.constant 0.000000e+00 : f32
        %32 = vector.broadcast %cst_23 : f32 to vector<1x128xf32>
        %c0_24 = arith.constant 0 : index
        %c0_25 = arith.constant 0 : index
        %33 = vector.load %arg13[%c0_24, %c0_25] : memref<1x128xf32, #tpu.memory_space<vmem>>, vector<1x128xf32>
        tpu.vector_store %arg13[%c0_24, %c0_25], %32 {strides = array<i32>} : memref<1x128xf32, #tpu.memory_space<vmem>>, vector<1x128xf32>,
      } else {
      }
      %c0 = arith.constant 0 : index
      %c0_5 = arith.constant 0 : index
      %12 = vector.load %arg2[%c0, %c0_5] : memref<8x32xbf16, #tpu.memory_space<vmem>>, vector<8x32xbf16>
      %c0_6 = arith.constant 0 : index
      %c0_7 = arith.constant 0 : index
      %13 = vector.load %arg3[%c0_6, %c0_7] : memref<32x128xbf16, #tpu.memory_space<vmem>>, vector<32x128xbf16>
      %cst = arith.constant dense<0.000000e+00> : vector<8x128xf32>
      %14 = tpu.matmul %12, %13, %cst {dimension_numbers = #tpu.dot_dimension_numbers<[1], [0], [0], [1], [0, 0, 1, 1], [], []>} : vector<8x32xbf16>, vector<32x128xbf16>, vector<8x128xf32> -> vector<8x128xf32>
      %15 = arith.index_cast %arg1 : i32 to index
      %c0_8 = arith.constant 0 : index
      %c0_9 = arith.constant 0 : index
      %16 = vector.load %arg10[%15, %c0_8, %c0_9] : memref<1x8x128xf32, #tpu.memory_space<vmem>>, vector<1x8x128xf32>
      %17 = vector.shape_cast %16 : vector<1x8x128xf32> to vector<8x128xf32>
      %18 = vector.shape_cast %14 : vector<8x128xf32> to vector<1x8x128xf32>
      tpu.vector_store %arg10[%15, %c0_8, %c0_9], %18 {strides = array<i32>} : memref<1x8x128xf32, #tpu.memory_space<vmem>>, vector<1x8x128xf32>,
      %c0_10 = arith.constant 0 : index
      %c0_11 = arith.constant 0 : index
      %19 = vector.load %arg12[%c0_10, %c0_11] : memref<1x128xf32, #tpu.memory_space<vmem>>, vector<1x128xf32>
      %cst_12 = arith.constant dense<0.000000e+00> : vector<128xf32>
      %20 = vector.multi_reduction <add>, %14, %cst_12 [0] : vector<8x128xf32> to vector<128xf32>
      %21 = vector.shape_cast %20 : vector<128xf32> to vector<1x128xf32>
      %22 = arith.addf %19, %21 : vector<1x128xf32>
      %c0_13 = arith.constant 0 : index
      %c0_14 = arith.constant 0 : index
      %23 = vector.load %arg12[%c0_13, %c0_14] : memref<1x128xf32, #tpu.memory_space<vmem>>, vector<1x128xf32>
      tpu.vector_store %arg12[%c0_13, %c0_14], %22 {strides = array<i32>} : memref<1x128xf32, #tpu.memory_space<vmem>>, vector<1x128xf32>,
      %c0_15 = arith.constant 0 : index
      %c0_16 = arith.constant 0 : index
      %24 = vector.load %arg13[%c0_15, %c0_16] : memref<1x128xf32, #tpu.memory_space<vmem>>, vector<1x128xf32>
      %25 = arith.mulf %14, %14 : vector<8x128xf32>
      %cst_17 = arith.constant dense<0.000000e+00> : vector<128xf32>
      %26 = vector.multi_reduction <add>, %25, %cst_17 [0] : vector<8x128xf32> to vector<128xf32>
      %27 = vector.shape_cast %26 : vector<128xf32> to vector<1x128xf32>
      %28 = arith.addf %24, %27 : vector<1x128xf32>
      %c0_18 = arith.constant 0 : index
      %c0_19 = arith.constant 0 : index
      %29 = vector.load %arg13[%c0_18, %c0_19] : memref<1x128xf32, #tpu.memory_space<vmem>>, vector<1x128xf32>
      tpu.vector_store %arg13[%c0_18, %c0_19], %28 {strides = array<i32>} : memref<1x128xf32, #tpu.memory_space<vmem>>, vector<1x128xf32>,
    } else {
    }
    %c1_i32 = arith.constant 1 : i32
    %3 = arith.cmpi eq, %arg0, %c1_i32 : i32
    %4 = arith.extui %3 : i1 to i32
    %c0_i32_1 = arith.constant 0 : i32
    %5 = arith.cmpi ne, %4, %c0_i32_1 : i32
    scf.if %5 {
      %c0_i32_3 = arith.constant 0 : i32
      %9 = arith.cmpi eq, %arg1, %c0_i32_3 : i32
      %10 = arith.extui %9 : i1 to i32
      %c0_i32_4 = arith.constant 0 : i32
      %11 = arith.cmpi ne, %10, %c0_i32_4 : i32
      scf.if %11 {
        %c0_25 = arith.constant 0 : index
        %c0_26 = arith.constant 0 : index
        %41 = vector.load %arg12[%c0_25, %c0_26] : memref<1x128xf32, #tpu.memory_space<vmem>>, vector<1x128xf32>
        %cst_27 = arith.constant 1.250000e-01 : f32
        %42 = vector.broadcast %cst_27 : f32 to vector<1x128xf32>
        %43 = arith.mulf %41, %42 : vector<1x128xf32>
        %c0_28 = arith.constant 0 : index
        %c0_29 = arith.constant 0 : index
        %44 = vector.load %arg13[%c0_28, %c0_29] : memref<1x128xf32, #tpu.memory_space<vmem>>, vector<1x128xf32>
        %cst_30 = arith.constant 1.250000e-01 : f32
        %45 = vector.broadcast %cst_30 : f32 to vector<1x128xf32>
        %46 = arith.mulf %44, %45 : vector<1x128xf32>
        %47 = arith.mulf %43, %43 : vector<1x128xf32>
        %48 = arith.subf %46, %47 : vector<1x128xf32>
        %c0_31 = arith.constant 0 : index
        %c0_32 = arith.constant 0 : index
        %49 = vector.load %arg4[%c0_31, %c0_32] : memref<1x128xf32, #tpu.memory_space<vmem>>, vector<1x128xf32>
        %cst_33 = arith.constant 9.99999974E-6 : f32
        %50 = vector.broadcast %cst_33 : f32 to vector<1x128xf32>
        %51 = arith.addf %48, %50 : vector<1x128xf32>
        %52 = math.rsqrt %51 : vector<1x128xf32>
        %53 = arith.mulf %49, %52 : vector<1x128xf32>
        %c0_34 = arith.constant 0 : index
        %c0_35 = arith.constant 0 : index
        %54 = vector.load %arg12[%c0_34, %c0_35] : memref<1x128xf32, #tpu.memory_space<vmem>>, vector<1x128xf32>
        tpu.vector_store %arg12[%c0_34, %c0_35], %53 {strides = array<i32>} : memref<1x128xf32, #tpu.memory_space<vmem>>, vector<1x128xf32>,
        %c0_36 = arith.constant 0 : index
        %c0_37 = arith.constant 0 : index
        %55 = vector.load %arg5[%c0_36, %c0_37] : memref<1x128xf32, #tpu.memory_space<vmem>>, vector<1x128xf32>
        %56 = arith.mulf %43, %53 : vector<1x128xf32>
        %57 = arith.subf %55, %56 : vector<1x128xf32>
        %c0_38 = arith.constant 0 : index
        %c0_39 = arith.constant 0 : index
        %58 = vector.load %arg13[%c0_38, %c0_39] : memref<1x128xf32, #tpu.memory_space<vmem>>, vector<1x128xf32>
        tpu.vector_store %arg13[%c0_38, %c0_39], %57 {strides = array<i32>} : memref<1x128xf32, #tpu.memory_space<vmem>>, vector<1x128xf32>,
        %cst_40 = arith.constant 0.000000e+00 : f32
        %59 = vector.broadcast %cst_40 : f32 to vector<1x128xf32>
        %c0_41 = arith.constant 0 : index
        %c0_42 = arith.constant 0 : index
        %60 = vector.load %arg14[%c0_41, %c0_42] : memref<1x128xf32, #tpu.memory_space<vmem>>, vector<1x128xf32>
        tpu.vector_store %arg14[%c0_41, %c0_42], %59 {strides = array<i32>} : memref<1x128xf32, #tpu.memory_space<vmem>>, vector<1x128xf32>,
        %cst_43 = arith.constant 0.000000e+00 : f32
        %61 = vector.broadcast %cst_43 : f32 to vector<1x128xf32>
        %c0_44 = arith.constant 0 : index
        %c0_45 = arith.constant 0 : index
        %62 = vector.load %arg15[%c0_44, %c0_45] : memref<1x128xf32, #tpu.memory_space<vmem>>, vector<1x128xf32>
        tpu.vector_store %arg15[%c0_44, %c0_45], %61 {strides = array<i32>} : memref<1x128xf32, #tpu.memory_space<vmem>>, vector<1x128xf32>,
      } else {
      }
      %12 = arith.index_cast %arg1 : i32 to index
      %c0 = arith.constant 0 : index
      %c0_5 = arith.constant 0 : index
      %13 = vector.load %arg10[%12, %c0, %c0_5] : memref<1x8x128xf32, #tpu.memory_space<vmem>>, vector<1x8x128xf32>
      %14 = vector.shape_cast %13 : vector<1x8x128xf32> to vector<8x128xf32>
      %c0_6 = arith.constant 0 : index
      %c0_7 = arith.constant 0 : index
      %15 = vector.load %arg12[%c0_6, %c0_7] : memref<1x128xf32, #tpu.memory_space<vmem>>, vector<1x128xf32>
      %16 = vector.broadcast %15 : vector<1x128xf32> to vector<8x128xf32>
      %17 = arith.mulf %14, %16 : vector<8x128xf32>
      %c0_8 = arith.constant 0 : index
      %c0_9 = arith.constant 0 : index
      %18 = vector.load %arg13[%c0_8, %c0_9] : memref<1x128xf32, #tpu.memory_space<vmem>>, vector<1x128xf32>
      %19 = vector.broadcast %18 : vector<1x128xf32> to vector<8x128xf32>
      %20 = arith.addf %17, %19 : vector<8x128xf32>
      %cst = arith.constant 0.000000e+00 : f32
      %21 = vector.broadcast %cst : f32 to vector<8x128xf32>
      %22 = arith.maximumf %20, %21 : vector<8x128xf32>
      %23 = arith.truncf %22 : vector<8x128xf32> to vector<8x128xbf16>
      %c0_10 = arith.constant 0 : index
      %c0_11 = arith.constant 0 : index
      %24 = vector.load %arg6[%c0_10, %c0_11] : memref<128x128xbf16, #tpu.memory_space<vmem>>, vector<128x128xbf16>
      %cst_12 = arith.constant dense<0.000000e+00> : vector<8x128xf32>
      %25 = tpu.matmul %23, %24, %cst_12 {dimension_numbers = #tpu.dot_dimension_numbers<[1], [0], [0], [1], [0, 0, 1, 1], [], []>} : vector<8x128xbf16>, vector<128x128xbf16>, vector<8x128xf32> -> vector<8x128xf32>
      %26 = arith.index_cast %arg1 : i32 to index
      %c0_13 = arith.constant 0 : index
      %c0_14 = arith.constant 0 : index
      %27 = vector.load %arg11[%26, %c0_13, %c0_14] : memref<1x8x128xf32, #tpu.memory_space<vmem>>, vector<1x8x128xf32>
      %28 = vector.shape_cast %27 : vector<1x8x128xf32> to vector<8x128xf32>
      %29 = vector.shape_cast %25 : vector<8x128xf32> to vector<1x8x128xf32>
      tpu.vector_store %arg11[%26, %c0_13, %c0_14], %29 {strides = array<i32>} : memref<1x8x128xf32, #tpu.memory_space<vmem>>, vector<1x8x128xf32>,
      %c0_15 = arith.constant 0 : index
      %c0_16 = arith.constant 0 : index
      %30 = vector.load %arg14[%c0_15, %c0_16] : memref<1x128xf32, #tpu.memory_space<vmem>>, vector<1x128xf32>
      %cst_17 = arith.constant dense<0.000000e+00> : vector<128xf32>
      %31 = vector.multi_reduction <add>, %25, %cst_17 [0] : vector<8x128xf32> to vector<128xf32>
      %32 = vector.shape_cast %31 : vector<128xf32> to vector<1x128xf32>
      %33 = arith.addf %30, %32 : vector<1x128xf32>
      %c0_18 = arith.constant 0 : index
      %c0_19 = arith.constant 0 : index
      %34 = vector.load %arg14[%c0_18, %c0_19] : memref<1x128xf32, #tpu.memory_space<vmem>>, vector<1x128xf32>
      tpu.vector_store %arg14[%c0_18, %c0_19], %33 {strides = array<i32>} : memref<1x128xf32, #tpu.memory_space<vmem>>, vector<1x128xf32>,
      %c0_20 = arith.constant 0 : index
      %c0_21 = arith.constant 0 : index
      %35 = vector.load %arg15[%c0_20, %c0_21] : memref<1x128xf32, #tpu.memory_space<vmem>>, vector<1x128xf32>
      %36 = arith.mulf %25, %25 : vector<8x128xf32>
      %cst_22 = arith.constant dense<0.000000e+00> : vector<128xf32>
      %37 = vector.multi_reduction <add>, %36, %cst_22 [0] : vector<8x128xf32> to vector<128xf32>
      %38 = vector.shape_cast %37 : vector<128xf32> to vector<1x128xf32>
      %39 = arith.addf %35, %38 : vector<1x128xf32>
      %c0_23 = arith.constant 0 : index
      %c0_24 = arith.constant 0 : index
      %40 = vector.load %arg15[%c0_23, %c0_24] : memref<1x128xf32, #tpu.memory_space<vmem>>, vector<1x128xf32>
      tpu.vector_store %arg15[%c0_23, %c0_24], %39 {strides = array<i32>} : memref<1x128xf32, #tpu.memory_space<vmem>>, vector<1x128xf32>,
    } else {
    }
    %c2_i32 = arith.constant 2 : i32
    %6 = arith.cmpi eq, %arg0, %c2_i32 : i32
    %7 = arith.extui %6 : i1 to i32
    %c0_i32_2 = arith.constant 0 : i32
    %8 = arith.cmpi ne, %7, %c0_i32_2 : i32
    scf.if %8 {
      %c0_i32_3 = arith.constant 0 : i32
      %9 = arith.cmpi eq, %arg1, %c0_i32_3 : i32
      %10 = arith.extui %9 : i1 to i32
      %c0_i32_4 = arith.constant 0 : i32
      %11 = arith.cmpi ne, %10, %c0_i32_4 : i32
      scf.if %11 {
        %c0_12 = arith.constant 0 : index
        %c0_13 = arith.constant 0 : index
        %24 = vector.load %arg14[%c0_12, %c0_13] : memref<1x128xf32, #tpu.memory_space<vmem>>, vector<1x128xf32>
        %cst_14 = arith.constant 1.250000e-01 : f32
        %25 = vector.broadcast %cst_14 : f32 to vector<1x128xf32>
        %26 = arith.mulf %24, %25 : vector<1x128xf32>
        %c0_15 = arith.constant 0 : index
        %c0_16 = arith.constant 0 : index
        %27 = vector.load %arg15[%c0_15, %c0_16] : memref<1x128xf32, #tpu.memory_space<vmem>>, vector<1x128xf32>
        %cst_17 = arith.constant 1.250000e-01 : f32
        %28 = vector.broadcast %cst_17 : f32 to vector<1x128xf32>
        %29 = arith.mulf %27, %28 : vector<1x128xf32>
        %30 = arith.mulf %26, %26 : vector<1x128xf32>
        %31 = arith.subf %29, %30 : vector<1x128xf32>
        %c0_18 = arith.constant 0 : index
        %c0_19 = arith.constant 0 : index
        %32 = vector.load %arg7[%c0_18, %c0_19] : memref<1x128xf32, #tpu.memory_space<vmem>>, vector<1x128xf32>
        %cst_20 = arith.constant 9.99999974E-6 : f32
        %33 = vector.broadcast %cst_20 : f32 to vector<1x128xf32>
        %34 = arith.addf %31, %33 : vector<1x128xf32>
        %35 = math.rsqrt %34 : vector<1x128xf32>
        %36 = arith.mulf %32, %35 : vector<1x128xf32>
        %c0_21 = arith.constant 0 : index
        %c0_22 = arith.constant 0 : index
        %37 = vector.load %arg14[%c0_21, %c0_22] : memref<1x128xf32, #tpu.memory_space<vmem>>, vector<1x128xf32>
        tpu.vector_store %arg14[%c0_21, %c0_22], %36 {strides = array<i32>} : memref<1x128xf32, #tpu.memory_space<vmem>>, vector<1x128xf32>,
        %c0_23 = arith.constant 0 : index
        %c0_24 = arith.constant 0 : index
        %38 = vector.load %arg8[%c0_23, %c0_24] : memref<1x128xf32, #tpu.memory_space<vmem>>, vector<1x128xf32>
        %39 = arith.mulf %26, %36 : vector<1x128xf32>
        %40 = arith.subf %38, %39 : vector<1x128xf32>
        %c0_25 = arith.constant 0 : index
        %c0_26 = arith.constant 0 : index
        %41 = vector.load %arg15[%c0_25, %c0_26] : memref<1x128xf32, #tpu.memory_space<vmem>>, vector<1x128xf32>
        tpu.vector_store %arg15[%c0_25, %c0_26], %40 {strides = array<i32>} : memref<1x128xf32, #tpu.memory_space<vmem>>, vector<1x128xf32>,
      } else {
      }
      %12 = arith.index_cast %arg1 : i32 to index
      %c0 = arith.constant 0 : index
      %c0_5 = arith.constant 0 : index
      %13 = vector.load %arg11[%12, %c0, %c0_5] : memref<1x8x128xf32, #tpu.memory_space<vmem>>, vector<1x8x128xf32>
      %14 = vector.shape_cast %13 : vector<1x8x128xf32> to vector<8x128xf32>
      %c0_6 = arith.constant 0 : index
      %c0_7 = arith.constant 0 : index
      %15 = vector.load %arg14[%c0_6, %c0_7] : memref<1x128xf32, #tpu.memory_space<vmem>>, vector<1x128xf32>
      %16 = vector.broadcast %15 : vector<1x128xf32> to vector<8x128xf32>
      %17 = arith.mulf %14, %16 : vector<8x128xf32>
      %c0_8 = arith.constant 0 : index
      %c0_9 = arith.constant 0 : index
      %18 = vector.load %arg15[%c0_8, %c0_9] : memref<1x128xf32, #tpu.memory_space<vmem>>, vector<1x128xf32>
      %19 = vector.broadcast %18 : vector<1x128xf32> to vector<8x128xf32>
      %20 = arith.addf %17, %19 : vector<8x128xf32>
      %cst = arith.constant 0.000000e+00 : f32
      %21 = vector.broadcast %cst : f32 to vector<8x128xf32>
      %22 = arith.maximumf %20, %21 : vector<8x128xf32>
      %c0_10 = arith.constant 0 : index
      %c0_11 = arith.constant 0 : index
      %23 = vector.load %arg9[%c0_10, %c0_11] : memref<8x128xf32, #tpu.memory_space<vmem>>, vector<8x128xf32>
      tpu.vector_store %arg9[%c0_10, %c0_11], %22 {strides = array<i32>} : memref<8x128xf32, #tpu.memory_space<vmem>>, vector<8x128xf32>,
    } else {
    }
    return
  }
  func.func @transform_0(%arg0: i32, %arg1: i32) -> (i32, i32) {
    %c0_i32 = arith.constant 0 : i32
    %0 = arith.cmpi eq, %arg0, %c0_i32 : i32
    %c0_i32_0 = arith.constant 0 : i32
    %1 = arith.select %0, %arg1, %c0_i32_0 : i32
    %c0_i32_1 = arith.constant 0 : i32
    %c0_i32_2 = arith.constant 0 : i32
    return %1, %c0_i32_1 : i32, i32
  }
  func.func @transform_1(%arg0: i32, %arg1: i32) -> (i32, i32) {
    %c0_i32 = arith.constant 0 : i32
    %c0_i32_0 = arith.constant 0 : i32
    %c0_i32_1 = arith.constant 0 : i32
    return %c0_i32, %c0_i32_0 : i32, i32
  }
  func.func @transform_2(%arg0: i32, %arg1: i32) -> (i32, i32) {
    %c0_i32 = arith.constant 0 : i32
    %c0_i32_0 = arith.constant 0 : i32
    %c0_i32_1 = arith.constant 0 : i32
    return %c0_i32, %c0_i32_0 : i32, i32
  }
  func.func @transform_3(%arg0: i32, %arg1: i32) -> (i32, i32) {
    %c0_i32 = arith.constant 0 : i32
    %c0_i32_0 = arith.constant 0 : i32
    %c0_i32_1 = arith.constant 0 : i32
    return %c0_i32, %c0_i32_0 : i32, i32
  }
  func.func @transform_4(%arg0: i32, %arg1: i32) -> (i32, i32) {
    %c0_i32 = arith.constant 0 : i32
    %c0_i32_0 = arith.constant 0 : i32
    %c0_i32_1 = arith.constant 0 : i32
    return %c0_i32, %c0_i32_0 : i32, i32
  }
  func.func @transform_5(%arg0: i32, %arg1: i32) -> (i32, i32) {
    %c0_i32 = arith.constant 0 : i32
    %c0_i32_0 = arith.constant 0 : i32
    %c0_i32_1 = arith.constant 0 : i32
    return %c0_i32, %c0_i32_0 : i32, i32
  }
  func.func @transform_6(%arg0: i32, %arg1: i32) -> (i32, i32) {
    %c0_i32 = arith.constant 0 : i32
    %c0_i32_0 = arith.constant 0 : i32
    %c0_i32_1 = arith.constant 0 : i32
    return %c0_i32, %c0_i32_0 : i32, i32
  }
  func.func @transform_7(%arg0: i32, %arg1: i32) -> (i32, i32) {
    %c2_i32 = arith.constant 2 : i32
    %0 = arith.cmpi eq, %arg0, %c2_i32 : i32
    %c0_i32 = arith.constant 0 : i32
    %1 = arith.select %0, %arg1, %c0_i32 : i32
    %c0_i32_0 = arith.constant 0 : i32
    %c0_i32_1 = arith.constant 0 : i32
    return %1, %c0_i32_0 : i32, i32
  }
}

</mosaic_0001>

<llo_original>
// kernel: tpu_custom_call.1
$region0: #{tpu_custom_call.1}
  #allocation0 [shape = 'u32[]', space=smem, size = 0x4, offset = 0x4, fixed_abs, tag = 'smem constant byte address 0x4 - core index']
  #allocation1 [shape = 'u32[144,128]{1,0:T(1,128)}', space=vmem, size = 0x12000, scoped, tag = 'internal scratch']
  #allocation2 [shape = 'f32[1,8,128]{2,1,0:T(8,128)}', space=vmem, size = 0x1000, scoped, tag = 'scratch operand']
  #allocation3 [shape = 'f32[1,8,128]{2,1,0:T(8,128)}', space=vmem, size = 0x1000, scoped, tag = 'scratch operand']
  #allocation4 [shape = 'f32[1,128]{1,0:T(1,128)}', space=vmem, size = 0x200, scoped, tag = 'scratch operand']
  #allocation5 [shape = 'f32[1,128]{1,0:T(1,128)}', space=vmem, size = 0x200, scoped, tag = 'scratch operand']
  #allocation6 [shape = 'f32[1,128]{1,0:T(1,128)}', space=vmem, size = 0x200, scoped, tag = 'scratch operand']
  #allocation7 [shape = 'f32[1,128]{1,0:T(1,128)}', space=vmem, size = 0x200, scoped, tag = 'scratch operand']
  %s0 = inlined_call_operand.hbm [shape: bf16[8,32], index: 0, kind: input, shape index: {}]
  %s1 = inlined_call_operand.hbm [shape: bf16[32,128], index: 1, kind: input, shape index: {}]
  %s2 = inlined_call_operand.vmem [shape: f32[1,128], index: 2, kind: input, shape index: {}]
  %s3 = inlined_call_operand.vmem [shape: f32[1,128], index: 3, kind: input, shape index: {}]
  %s4 = inlined_call_operand.hbm [shape: bf16[128,128], index: 4, kind: input, shape index: {}]
  %s5 = inlined_call_operand.vmem [shape: f32[1,128], index: 5, kind: input, shape index: {}]
  %s6 = inlined_call_operand.vmem [shape: f32[1,128], index: 6, kind: input, shape index: {}]
  %s7 = inlined_call_operand.hbm [shape: f32[8,128], index: 7, kind: output, shape index: {}]
  %s8 = sld [smem:[#allocation0]]
  $region97: #{tpu_custom_call.1} parent=0
    _
  %s10 = ssub.s32 1, %s8
  %s11 = scalar_select 0, %s10, %s8
  $region1: #{tpu_custom_call.1} parent=0
    #allocation8 [shape = 'u8[4096]{0}', space=vmem, size = 0x1000, scoped, tag = 'input window, operand 0']
    #allocation9 [shape = 's32[2]{0}', space=sflag, size = 0x8, scoped, tag = 'scoped memory for tpu_custom_call.1']
    #allocation10 [shape = 's32[2]{0}', space=sflag, size = 0x8, scoped, tag = 'scoped memory for tpu_custom_call.1']
    #allocation11 [shape = 'u8[8192]{0}', space=vmem, size = 0x2000, scoped, tag = 'input window, operand 1, single buffered']
    #allocation12 [shape = 's32[1]{0}', space=sflag, size = 0x4, scoped, tag = 'scoped memory for tpu_custom_call.1']
    #allocation13 [shape = 'u8[32768]{0}', space=vmem, size = 0x8000, scoped, tag = 'input window, operand 4, single buffered']
    #allocation14 [shape = 'u8[8192]{0}', space=vmem, size = 0x2000, scoped, tag = 'output window, operand 0']
    %12 = vsyncpa [#allocation9], 0
    %s13 = scalar_lea.sflag [#allocation9], 1
    %14 = vsyncpa %s13, 0
    %15 = vsyncpa [#allocation12], 0
    %16 = vsyncpa [#allocation10], 0
    %s17 = scalar_lea.sflag [#allocation10], 1
    %18 = vsyncpa %s17, 0
    loop: start=0, step=1, limit=5
    $region2: #{tpu_custom_call.1} parent=1 // loop_pre_header
      _
    $region3: #{tpu_custom_call.1} parent=1 // loop_header
      %s20 = sphi 0, %s24
      %p21 = scmp.ge.s32.totalorder %s20, 5
      %s27 = sphi 0, %s39
      %s28 = sphi 0, %s35
      %s29 = sphi 0, %s27
      %s30 = sphi 0, %s28
      %s31 = sphi 0, %s29
      %s32 = sphi 0, %s30
      %s46 = sphi 0, %s48
      %s49 = sphi 0, %s46
      %s50 = sphi 0, %s49
      %s66 = sphi 0, %s50
      %s70 = sphi 0, %s70
      %s72 = sphi 0, %s70
      %s73 = sphi 0, %s72
      %s87 = sphi 0, %s73
      %s91 = sphi 0, %s91
      %s93 = sphi 0, %s91
      %s94 = sphi 0, %s93
      %s108 = sphi 0, %s94
      %s112 = sphi 0, %s112
      %s114 = sphi 0, %s112
      %s115 = sphi 0, %s114
      %s129 = sphi 0, %s115
      %s133 = sphi 0, %s133
      %s135 = sphi 0, %s133
      %s136 = sphi 0, %s135
      %s150 = sphi 0, %s136
      %s154 = sphi 0, %s154
      %s156 = sphi 0, %s154
      %s157 = sphi 0, %s156
      %s171 = sphi 0, %s157
      %s175 = sphi 0, %s175
      %s177 = sphi 0, %s175
      %s178 = sphi 0, %s177
      %s192 = sphi 0, %s178
      %s202 = sphi 0, %s204
      %s205 = sphi 0, %s202
      %s206 = sphi 0, %s205
      %s222 = sphi 0, %s206
    $region4: #{tpu_custom_call.1} parent=1 // loop_header_branch
      %23 = sbr.rel (%p21) target = $region8
    $region5: #{tpu_custom_call.1} parent=1 // loop_body
      %s25 = ssub.s32 %s20, 1
      %s26 = ssub.s32 %s20, 2
      %s33 = sadd.s32 1, %s28
      %p34 = scmp.ge.s32.totalorder %s33, 1
      %s35 = scalar_select %p34, 0, %s33
      %s36 = sadd.s32 1, %s27
      %s37 = scalar_select %p34, %s36, %s27
      %p38 = scmp.ge.s32.totalorder %s37, 3
      %s39 = scalar_select %p38, 0, %s37
      %p40 = scmp.eq.s32.totalorder %s27, 0
      %s41 = scalar_select %p40, %s28, 0
      %p42 = scmp.eq.s32.totalorder %s39, 0
      %s43 = scalar_select %p42, %s35, 0
      %s44 = ssub.s32 %s41, %s43
      %p45 = scmp.eq.s32.totalorder %s44, 0
      %s47 = sadd.s32 %s46, 1
      %s48 = scalar_select %p45, %s46, %s47
      %p51 = pneg %p45
      %p52 = scmp.eq.s32.totalorder %s20, 2
      %p53 = por %p51, %p52
      %p54 = scmp.ne.s32.totalorder %s46, %s49
      %p55 = scmp.eq.s32.totalorder %s20, 0
      %p56 = por %p54, %p55
      %p57 = scmp.ne.s32.totalorder %s46, %s49
      %p58 = scmp.eq.s32.totalorder %s25, 2
      %p59 = por %p57, %p58
      %p60 = scmp.ne.s32.totalorder %s49, %s50
      %p61 = scmp.eq.s32.totalorder %s25, 0
      %p62 = por %p60, %p61
      %p63 = scmp.ne.s32.totalorder %s49, %s50
      %p64 = scmp.eq.s32.totalorder %s26, 2
      %p65 = por %p63, %p64
      %p67 = scmp.ne.s32.totalorder %s50, %s66
      %p68 = scmp.eq.s32.totalorder %s26, 0
      %p69 = por %p67, %p68
      %s71 = sadd.s32 %s70, 1
      %p74 = scmp.eq.s32.totalorder %s20, 2
      %p75 = scmp.ne.s32.totalorder %s70, %s72
      %p76 = scmp.eq.s32.totalorder %s20, 0
      %p77 = por %p75, %p76
      %p78 = scmp.ne.s32.totalorder %s70, %s72
      %p79 = scmp.eq.s32.totalorder %s25, 2
      %p80 = por %p78, %p79
      %p81 = scmp.ne.s32.totalorder %s72, %s73
      %p82 = scmp.eq.s32.totalorder %s25, 0
      %p83 = por %p81, %p82
      %p84 = scmp.ne.s32.totalorder %s72, %s73
      %p85 = scmp.eq.s32.totalorder %s26, 2
      %p86 = por %p84, %p85
      %p88 = scmp.ne.s32.totalorder %s73, %s87
      %p89 = scmp.eq.s32.totalorder %s26, 0
      %p90 = por %p88, %p89
      %s92 = sadd.s32 %s91, 1
      %p95 = scmp.eq.s32.totalorder %s20, 2
      %p96 = scmp.ne.s32.totalorder %s91, %s93
      %p97 = scmp.eq.s32.totalorder %s20, 0
      %p98 = por %p96, %p97
      %p99 = scmp.ne.s32.totalorder %s91, %s93
      %p100 = scmp.eq.s32.totalorder %s25, 2
      %p101 = por %p99, %p100
      %p102 = scmp.ne.s32.totalorder %s93, %s94
      %p103 = scmp.eq.s32.totalorder %s25, 0
      %p104 = por %p102, %p103
      %p105 = scmp.ne.s32.totalorder %s93, %s94
      %p106 = scmp.eq.s32.totalorder %s26, 2
      %p107 = por %p105, %p106
      %p109 = scmp.ne.s32.totalorder %s94, %s108
      %p110 = scmp.eq.s32.totalorder %s26, 0
      %p111 = por %p109, %p110
      %s113 = sadd.s32 %s112, 1
      %p116 = scmp.eq.s32.totalorder %s20, 2
      %p117 = scmp.ne.s32.totalorder %s112, %s114
      %p118 = scmp.eq.s32.totalorder %s20, 0
      %p119 = por %p117, %p118
      %p120 = scmp.ne.s32.totalorder %s112, %s114
      %p121 = scmp.eq.s32.totalorder %s25, 2
      %p122 = por %p120, %p121
      %p123 = scmp.ne.s32.totalorder %s114, %s115
      %p124 = scmp.eq.s32.totalorder %s25, 0
      %p125 = por %p123, %p124
      %p126 = scmp.ne.s32.totalorder %s114, %s115
      %p127 = scmp.eq.s32.totalorder %s26, 2
      %p128 = por %p126, %p127
      %p130 = scmp.ne.s32.totalorder %s115, %s129
      %p131 = scmp.eq.s32.totalorder %s26, 0
      %p132 = por %p130, %p131
      %s134 = sadd.s32 %s133, 1
      %p137 = scmp.eq.s32.totalorder %s20, 2
      %p138 = scmp.ne.s32.totalorder %s133, %s135
      %p139 = scmp.eq.s32.totalorder %s20, 0
      %p140 = por %p138, %p139
      %p141 = scmp.ne.s32.totalorder %s133, %s135
      %p142 = scmp.eq.s32.totalorder %s25, 2
      %p143 = por %p141, %p142
      %p144 = scmp.ne.s32.totalorder %s135, %s136
      %p145 = scmp.eq.s32.totalorder %s25, 0
      %p146 = por %p144, %p145
      %p147 = scmp.ne.s32.totalorder %s135, %s136
      %p148 = scmp.eq.s32.totalorder %s26, 2
      %p149 = por %p147, %p148
      %p151 = scmp.ne.s32.totalorder %s136, %s150
      %p152 = scmp.eq.s32.totalorder %s26, 0
      %p153 = por %p151, %p152
      %s155 = sadd.s32 %s154, 1
      %p158 = scmp.eq.s32.totalorder %s20, 2
      %p159 = scmp.ne.s32.totalorder %s154, %s156
      %p160 = scmp.eq.s32.totalorder %s20, 0
      %p161 = por %p159, %p160
      %p162 = scmp.ne.s32.totalorder %s154, %s156
      %p163 = scmp.eq.s32.totalorder %s25, 2
      %p164 = por %p162, %p163
      %p165 = scmp.ne.s32.totalorder %s156, %s157
      %p166 = scmp.eq.s32.totalorder %s25, 0
      %p167 = por %p165, %p166
      %p168 = scmp.ne.s32.totalorder %s156, %s157
      %p169 = scmp.eq.s32.totalorder %s26, 2
      %p170 = por %p168, %p169
      %p172 = scmp.ne.s32.totalorder %s157, %s171
      %p173 = scmp.eq.s32.totalorder %s26, 0
      %p174 = por %p172, %p173
      %s176 = sadd.s32 %s175, 1
      %p179 = scmp.eq.s32.totalorder %s20, 2
      %p180 = scmp.ne.s32.totalorder %s175, %s177
      %p181 = scmp.eq.s32.totalorder %s20, 0
      %p182 = por %p180, %p181
      %p183 = scmp.ne.s32.totalorder %s175, %s177
      %p184 = scmp.eq.s32.totalorder %s25, 2
      %p185 = por %p183, %p184
      %p186 = scmp.ne.s32.totalorder %s177, %s178
      %p187 = scmp.eq.s32.totalorder %s25, 0
      %p188 = por %p186, %p187
      %p189 = scmp.ne.s32.totalorder %s177, %s178
      %p190 = scmp.eq.s32.totalorder %s26, 2
      %p191 = por %p189, %p190
      %p193 = scmp.ne.s32.totalorder %s178, %s192
      %p194 = scmp.eq.s32.totalorder %s26, 0
      %p195 = por %p193, %p194
      %p196 = scmp.eq.s32.totalorder %s27, 2
      %s197 = scalar_select %p196, %s28, 0
      %p198 = scmp.eq.s32.totalorder %s39, 2
      %s199 = scalar_select %p198, %s35, 0
      %s200 = ssub.s32 %s197, %s199
      %p201 = scmp.eq.s32.totalorder %s200, 0
      %s203 = sadd.s32 %s202, 1
      %s204 = scalar_select %p201, %s202, %s203
      %p207 = pneg %p201
      %p208 = scmp.eq.s32.totalorder %s20, 2
      %p209 = por %p207, %p208
      %p210 = scmp.ne.s32.totalorder %s202, %s205
      %p211 = scmp.eq.s32.totalorder %s20, 0
      %p212 = por %p210, %p211
      %p213 = scmp.ne.s32.totalorder %s202, %s205
      %p214 = scmp.eq.s32.totalorder %s25, 2
      %p215 = por %p213, %p214
      %p216 = scmp.ne.s32.totalorder %s205, %s206
      %p217 = scmp.eq.s32.totalorder %s25, 0
      %p218 = por %p216, %p217
      %p219 = scmp.ne.s32.totalorder %s205, %s206
      %p220 = scmp.eq.s32.totalorder %s26, 2
      %p221 = por %p219, %p220
      %p223 = scmp.ne.s32.totalorder %s206, %s222
      %p224 = scmp.eq.s32.totalorder %s26, 0
      %p225 = por %p223, %p224
      %p226 = scmp.le.s32.totalorder 1, %s20
      %p227 = scmp.lt.s32.totalorder %s20, 4
      %p228 = pnand %p226, %p227
      %p229 = pneg %p228
      // Predicated region
      $region9: #{tpu_custom_call.1} parent=5 // pred_check
        _
      $region10: #{tpu_custom_call.1} parent=5 // pred_check_branch
        %231 = sbr.rel (%p228) target = $region12
      $region11: #{tpu_custom_call.1} parent=5 // pred_region
        %s232 = ssub.s32 %s20, 1
        // Predicated region
        $region13: #{tpu_custom_call.1} parent=11 // pred_check
          %p233 = pneg %p83
        $region14: #{tpu_custom_call.1} parent=11 // pred_check_branch
          %235 = sbr.rel (%p233) target = $region16
        $region15: #{tpu_custom_call.1} parent=11 // pred_region
          %s237 = ssub.s32 256, 256
          %238 = vsyncadd [#allocation12], %s237
          %s239 = sshll.u32 [#allocation11], 4
          %s240 = int_to_ptr.vmem [resolvable:$true] %s239
          %245 = dma.hbm_to_vmem [thread:$0]  %s1, 256, %s240, [#allocation12], 64, 64, 4
        $region16: #{tpu_custom_call.1} parent=11 // pred_fallthru
          _
        // Predicated region
        $region17: #{tpu_custom_call.1} parent=11 // pred_check
          %p246 = pneg %p104
        $region18: #{tpu_custom_call.1} parent=11 // pred_check_branch
          %248 = sbr.rel (%p246) target = $region20
        $region19: #{tpu_custom_call.1} parent=11 // pred_region
          _
        $region20: #{tpu_custom_call.1} parent=11 // pred_fallthru
          _
        // Predicated region
        $region21: #{tpu_custom_call.1} parent=11 // pred_check
          %p249 = pneg %p125
        $region22: #{tpu_custom_call.1} parent=11 // pred_check_branch
          %251 = sbr.rel (%p249) target = $region24
        $region23: #{tpu_custom_call.1} parent=11 // pred_region
          _
        $region24: #{tpu_custom_call.1} parent=11 // pred_fallthru
          _
        // Predicated region
        $region25: #{tpu_custom_call.1} parent=11 // pred_check
          %p252 = pneg %p146
        $region26: #{tpu_custom_call.1} parent=11 // pred_check_branch
          %254 = sbr.rel (%p252) target = $region28
        $region27: #{tpu_custom_call.1} parent=11 // pred_region
          %s256 = ssub.s32 1024, 1024
          %257 = vsyncadd [#allocation12], %s256
          %s258 = sshll.u32 [#allocation13], 4
          %s259 = int_to_ptr.vmem [resolvable:$true] %s258
          %264 = dma.hbm_to_vmem [thread:$0]  %s4, 1024, %s259, [#allocation12], 64, 64, 4
        $region28: #{tpu_custom_call.1} parent=11 // pred_fallthru
          _
        // Predicated region
        $region29: #{tpu_custom_call.1} parent=11 // pred_check
          %p265 = pneg %p167
        $region30: #{tpu_custom_call.1} parent=11 // pred_check_branch
          %267 = sbr.rel (%p265) target = $region32
        $region31: #{tpu_custom_call.1} parent=11 // pred_region
          _
        $region32: #{tpu_custom_call.1} parent=11 // pred_fallthru
          _
        // Predicated region
        $region33: #{tpu_custom_call.1} parent=11 // pred_check
          %p268 = pneg %p188
        $region34: #{tpu_custom_call.1} parent=11 // pred_check_branch
          %270 = sbr.rel (%p268) target = $region36
        $region35: #{tpu_custom_call.1} parent=11 // pred_region
          _
        $region36: #{tpu_custom_call.1} parent=11 // pred_fallthru
          _
      $region12: #{tpu_custom_call.1} parent=5 // pred_fallthru
        _
      %p271 = scmp.lt.s32.totalorder %s20, 3
      // Predicated region
      $region37: #{tpu_custom_call.1} parent=5 // pred_check
        %p272 = pneg %p271
      $region38: #{tpu_custom_call.1} parent=5 // pred_check_branch
        %274 = sbr.rel (%p272) target = $region40
      $region39: #{tpu_custom_call.1} parent=5 // pred_region
        // Predicated region
        $region41: #{tpu_custom_call.1} parent=39 // pred_check
          %p275 = pneg %p56
        $region42: #{tpu_custom_call.1} parent=39 // pred_check_branch
          %277 = sbr.rel (%p275) target = $region44
        $region43: #{tpu_custom_call.1} parent=39 // pred_region
          %s278 = sand.u32 %s46, 1
          %s279 = scalar_lea.sflag [#allocation9], %s278
          %s280 = sand.u32 %s46, 1
          %s281 = smul.addr %s280, 4
          %s282 = scalar_lea.vmem [#allocation8], %s281
          %p283 = scmp.eq.s32.totalorder %s27, 0
          %s284 = scalar_select %p283, %s28, 0
          %s286 = ssub.s32 64, 64
          %287 = vsyncadd %s279, %s286
          %s288 = smul.addr %s284, 64
          %s289 = scalar_lea.hbm %s0, %s288
          %s291 = sshll.u32 %s282, 4
          %s292 = int_to_ptr.vmem [resolvable:$true] %s291
          %294 = dma.hbm_to_vmem [thread:$0]  %s289, 64, %s292, %s279
        $region44: #{tpu_custom_call.1} parent=39 // pred_fallthru
          _
      $region40: #{tpu_custom_call.1} parent=5 // pred_fallthru
        _
      %p295 = scmp.le.s32.totalorder 1, %s20
      %p296 = scmp.lt.s32.totalorder %s20, 4
      %p297 = pnand %p295, %p296
      %p298 = pneg %p297
      // Predicated region
      $region45: #{tpu_custom_call.1} parent=5 // pred_check
        _
      $region46: #{tpu_custom_call.1} parent=5 // pred_check_branch
        %300 = sbr.rel (%p297) target = $region48
      $region47: #{tpu_custom_call.1} parent=5 // pred_region
        %s301 = ssub.s32 %s20, 1
        %s302 = sand.u32 %s49, 1
        %s303 = scalar_lea.sflag [#allocation9], %s302
        %s304 = sand.u32 %s49, 1
        %s305 = smul.addr %s304, 4
        %s306 = scalar_lea.vmem [#allocation8], %s305
        // Predicated region
        $region49: #{tpu_custom_call.1} parent=47 // pred_check
          %p307 = pneg %p62
        $region50: #{tpu_custom_call.1} parent=47 // pred_check_branch
          %309 = sbr.rel (%p307) target = $region52
        $region51: #{tpu_custom_call.1} parent=47 // pred_region
          %310 = dma.done %s303, 64
        $region52: #{tpu_custom_call.1} parent=47 // pred_fallthru
          _
        // Predicated region
        $region53: #{tpu_custom_call.1} parent=47 // pred_check
          %p311 = pneg %p83
        $region54: #{tpu_custom_call.1} parent=47 // pred_check_branch
          %313 = sbr.rel (%p311) target = $region56
        $region55: #{tpu_custom_call.1} parent=47 // pred_region
          %314 = dma.done [#allocation12], 256
        $region56: #{tpu_custom_call.1} parent=47 // pred_fallthru
          _
        // Predicated region
        $region57: #{tpu_custom_call.1} parent=47 // pred_check
          %p315 = pneg %p146
        $region58: #{tpu_custom_call.1} parent=47 // pred_check_branch
          %317 = sbr.rel (%p315) target = $region60
        $region59: #{tpu_custom_call.1} parent=47 // pred_region
          %318 = dma.done [#allocation12], 1024
        $region60: #{tpu_custom_call.1} parent=47 // pred_fallthru
          _
        %s319 = sand.u32 %s49, 1
        %s320 = scalar_lea.sflag [#allocation9], %s319
        %s321 = sand.u32 %s49, 1
        %s322 = smul.addr %s321, 4
        %s323 = scalar_lea.vmem [#allocation8], %s322
        %p324 = pneg %p62
        %p325 = pneg %p59
        %p326 = pneg %p83
        %p327 = pneg %p80
        %p328 = pneg %p104
        %p329 = pneg %p101
        %p330 = pneg %p125
        %p331 = pneg %p122
        %p332 = pneg %p146
        %p333 = pneg %p143
        %p334 = pneg %p167
        %p335 = pneg %p164
        %p336 = pneg %p188
        %p337 = pneg %p185
        %p338 = pneg %p218
        %p339 = pneg %p215
        %s340 = sand.u32 %s205, 1
        %s341 = scalar_lea.sflag [#allocation10], %s340
        %s342 = sand.u32 %s205, 1
        %s343 = smul.addr %s342, 8
        %s344 = scalar_lea.vmem [#allocation14], %s343
        %p345 = scmp.eq.s32.totalorder %s29, 0
        %s346 = scalar_select %p345, %s30, 0
        %p347 = scmp.eq.s32.totalorder %s29, 2
        %s348 = scalar_select %p347, %s30, 0
        %p350 = scmp.eq.s32.totalorder %s29, 0
        // Predicated region
        $region61: #{tpu_custom_call.1} parent=47 // pred_check
          %p351 = pneg %p350
        $region62: #{tpu_custom_call.1} parent=47 // pred_check_branch
          %353 = sbr.rel (%p351) target = $region64
        $region63: #{tpu_custom_call.1} parent=47 // pred_region
          %p354 = scmp.eq.s32.totalorder %s30, 0
          // Predicated region
          $region65: #{tpu_custom_call.1} parent=63 // pred_check
            %p355 = pneg %p354
          $region66: #{tpu_custom_call.1} parent=63 // pred_check_branch
            %357 = sbr.rel (%p355) target = $region68
          $region67: #{tpu_custom_call.1} parent=63 // pred_region
            %358 = vst [vmem:[#allocation4] sm:$0x1] 0.0
            %359 = vst [vmem:[#allocation5] sm:$0x1] 0.0
          $region68: #{tpu_custom_call.1} parent=63 // pred_fallthru
            _
          %v360 = vld [vmem:[%s306] sm:$0xf]
          %v361 = vld [vmem:[#allocation11] sm:$0xf]
          %v362 = vld [vmem:[#allocation11 + $0x4] sm:$0xf]
          %v363 = vld [vmem:[#allocation11 + $0x8] sm:$0xf]
          %v364 = vld [vmem:[#allocation11 + $0xc] sm:$0xf]
          %v369 = vunpack.c.l.b16 %v361
          %v370 = vunpack.c.l.b16 %v362
          %v371 = vunpack.c.l.b16 %v363
          %v372 = vunpack.c.l.b16 %v364
          %v373 = vpack.c.b16 %v370, %v369
          %v374 = vpack.c.b16 %v372, %v371
          %vm377 = vcmask 261120
          %v379 = vsel %vm377, %v360, 0
          %381 = vmatprep.subr.bf16.mxu0 0
          %382 = vmatpush1.bf16.msra.mxu0 %v373
          %383 = vmatprep.subr.bf16.mxu0 0
          %384 = vmatpush1.bf16.msra.mxu0 %v374
          %385 = vmatprep.subr.bf16.mxu0 0
          %386 = vmatpush1.bf16.msra.mxu0 0
          %387 = vmatprep.subr.bf16.mxu0 0
          %388 = vmatpush1.bf16.msra.mxu0 0
          %389 = vmatprep.subr.bf16.mxu0 0
          %390 = vmatpush1.bf16.msra.mxu0 0
          %391 = vmatprep.subr.bf16.mxu0 0
          %392 = vmatpush1.bf16.msra.mxu0 0
          %393 = vmatprep.subr.bf16.mxu0 0
          %394 = vmatpush1.bf16.msra.mxu0 0
          %395 = vmatprep.subr.bf16.mxu0 0
          %396 = vmatpush1.bf16.msra.mxu0 0
          %397 = vmatprep.subr.bf16.mxu0 0
          %398 = vmatpush1.bf16.msra.mxu0 0
          %399 = vmatprep.subr.bf16.mxu0 0
          %400 = vmatpush1.bf16.msra.mxu0 0
          %401 = vmatprep.subr.bf16.mxu0 0
          %402 = vmatpush1.bf16.msra.mxu0 0
          %403 = vmatprep.subr.bf16.mxu0 0
          %404 = vmatpush1.bf16.msra.mxu0 0
          %405 = vmatprep.subr.bf16.mxu0 0
          %406 = vmatpush1.bf16.msra.mxu0 0
          %407 = vmatprep.subr.bf16.mxu0 0
          %408 = vmatpush1.bf16.msra.mxu0 0
          %409 = vmatprep.subr.bf16.mxu0 0
          %410 = vmatpush1.bf16.msra.mxu0 0
          %411 = vmatprep.subr.bf16.mxu0 0
          %412 = vmatpush1.bf16.msra.mxu0 0
          %413 = vmatprep.mubr.bf16.mxu0 0
          %414 = vmatmul.mubr.bf16.gmra.mrb[0].mxu0 %v379
          %v415 = vpop.f32.mrb[0].mxu0
          %v416 = vadd.f32 0.0, %v415
          %v417 = vpop.f32.mrb[0].mxu0
          %v418 = vpop.f32.mrb[0].mxu0
          %v419 = vpop.f32.mrb[0].mxu0
          %420 = vdwg.mxu0
          %s421 = smul.u32 %s30, 8
          %s422 = scalar_lea.vmem [#allocation2], %s421
          %423 = vst [vmem:[%s422] sm:$0xff] %v416
          %v424 = vld [vmem:[#allocation4] sm:$0x1]
          %v425 = vrot.slane %v416, 4
          %v426 = vadd.f32 %v416, %v425
          %v427 = vrot.slane %v426, 2
          %v428 = vadd.f32 %v426, %v427
          %v429 = vrot.slane %v428, 1
          %v430 = vadd.f32 %v428, %v429
          %v431 = vadd.f32 %v424, %v430
          %432 = vst [vmem:[#allocation4] sm:$0x1] %v431
          %v433 = vld [vmem:[#allocation5] sm:$0x1]
          %v434 = vmul.f32 %v416, %v416
          %v435 = vrot.slane %v434, 4
          %v436 = vadd.f32 %v434, %v435
          %v437 = vrot.slane %v436, 2
          %v438 = vadd.f32 %v436, %v437
          %v439 = vrot.slane %v438, 1
          %v440 = vadd.f32 %v438, %v439
          %v441 = vadd.f32 %v433, %v440
          %442 = vst [vmem:[#allocation5] sm:$0x1] %v441
        $region64: #{tpu_custom_call.1} parent=47 // pred_fallthru
          _
        %p443 = scmp.eq.s32.totalorder %s29, 1
        // Predicated region
        $region69: #{tpu_custom_call.1} parent=47 // pred_check
          %p444 = pneg %p443
        $region70: #{tpu_custom_call.1} parent=47 // pred_check_branch
          %446 = sbr.rel (%p444) target = $region72
        $region71: #{tpu_custom_call.1} parent=47 // pred_region
          %p447 = scmp.eq.s32.totalorder %s30, 0
          // Predicated region
          $region73: #{tpu_custom_call.1} parent=71 // pred_check
            %p448 = pneg %p447
          $region74: #{tpu_custom_call.1} parent=71 // pred_check_branch
            %450 = sbr.rel (%p448) target = $region76
          $region75: #{tpu_custom_call.1} parent=71 // pred_region
            %v451 = vld [vmem:[#allocation4] sm:$0x1]
            %v452 = vmul.f32 %v451, 0.125
            %v453 = vld [vmem:[#allocation5] sm:$0x1]
            %v454 = vmul.f32 %v453, 0.125
            %v455 = vmul.f32 %v452, %v452
            %v456 = vsub.f32 %v454, %v455
            %v457 = vld [vmem:[%s2] sm:$0x1]
            %v458 = vadd.f32 %v456, 1e-05
            %v459 = vrsqrt.pop %v458
            %v460 = vmul.f32 %v457, %v459
            %461 = vst [vmem:[#allocation4] sm:$0x1] %v460
            %v462 = vld [vmem:[%s3] sm:$0x1]
            %v463 = vmul.f32 %v452, %v460
            %v464 = vsub.f32 %v462, %v463
            %465 = vst [vmem:[#allocation5] sm:$0x1] %v464
            %466 = vst [vmem:[#allocation6] sm:$0x1] 0.0
            %467 = vst [vmem:[#allocation7] sm:$0x1] 0.0
          $region76: #{tpu_custom_call.1} parent=71 // pred_fallthru
            _
          %s468 = smul.u32 %s30, 8
          %s469 = scalar_lea.vmem [#allocation2], %s468
          %v470 = vld [vmem:[%s469] sm:$0xff]
          %v471 = vld [vmem:[#allocation4] sm:$0x1]
          %v473 = vlaneseq
          %v474 = vshrl.u32 %v473, 7
          %v475 = vsub.s32 0, %v474
          %v476 = vrot.slane %v471, %v475
          %v478 = vmul.f32 %v470, %v476
          %v479 = vld [vmem:[#allocation5] sm:$0x1]
          %v481 = vlaneseq
          %v482 = vshrl.u32 %v481, 7
          %v483 = vsub.s32 0, %v482
          %v484 = vrot.slane %v479, %v483
          %v486 = vadd.f32 %v478, %v484
          %v487 = vmax.f32 %v486, 0.0
          %v488 = vpack.c.bf16 %v487, %v487
          %v489 = vld [vmem:[#allocation13] sm:$0xf]
          %v490 = vld [vmem:[#allocation13 + $0x4] sm:$0xf]
          %v491 = vld [vmem:[#allocation13 + $0x8] sm:$0xf]
          %v492 = vld [vmem:[#allocation13 + $0xc] sm:$0xf]
          %v493 = vld [vmem:[#allocation13 + $0x10] sm:$0xf]
          %v494 = vld [vmem:[#allocation13 + $0x14] sm:$0xf]
          %v495 = vld [vmem:[#allocation13 + $0x18] sm:$0xf]
          %v496 = vld [vmem:[#allocation13 + $0x1c] sm:$0xf]
          %v497 = vld [vmem:[#allocation13 + $0x20] sm:$0xf]
          %v498 = vld [vmem:[#allocation13 + $0x24] sm:$0xf]
          %v499 = vld [vmem:[#allocation13 + $0x28] sm:$0xf]
          %v500 = vld [vmem:[#allocation13 + $0x2c] sm:$0xf]
          %v501 = vld [vmem:[#allocation13 + $0x30] sm:$0xf]
          %v502 = vld [vmem:[#allocation13 + $0x34] sm:$0xf]
          %v503 = vld [vmem:[#allocation13 + $0x38] sm:$0xf]
          %v504 = vld [vmem:[#allocation13 + $0x3c] sm:$0xf]
          %v521 = vunpack.c.l.b16 %v489
          %v522 = vunpack.c.l.b16 %v490
          %v523 = vunpack.c.l.b16 %v491
          %v524 = vunpack.c.l.b16 %v492
          %v525 = vunpack.c.l.b16 %v493
          %v526 = vunpack.c.l.b16 %v494
          %v527 = vunpack.c.l.b16 %v495
          %v528 = vunpack.c.l.b16 %v496
          %v529 = vunpack.c.l.b16 %v497
          %v530 = vunpack.c.l.b16 %v498
          %v531 = vunpack.c.l.b16 %v499
          %v532 = vunpack.c.l.b16 %v500
          %v533 = vunpack.c.l.b16 %v501
          %v534 = vunpack.c.l.b16 %v502
          %v535 = vunpack.c.l.b16 %v503
          %v536 = vunpack.c.l.b16 %v504
          %v537 = vpack.c.b16 %v522, %v521
          %v538 = vpack.c.b16 %v524, %v523
          %v539 = vpack.c.b16 %v526, %v525
          %v540 = vpack.c.b16 %v528, %v527
          %v541 = vpack.c.b16 %v530, %v529
          %v542 = vpack.c.b16 %v532, %v531
          %v543 = vpack.c.b16 %v534, %v533
          %v544 = vpack.c.b16 %v536, %v535
          %553 = vmatprep.subr.bf16.mxu0 0
          %554 = vmatpush1.bf16.msra.mxu0 %v537
          %555 = vmatprep.subr.bf16.mxu0 0
          %556 = vmatpush1.bf16.msra.mxu0 %v538
          %557 = vmatprep.subr.bf16.mxu0 0
          %558 = vmatpush1.bf16.msra.mxu0 %v539
          %559 = vmatprep.subr.bf16.mxu0 0
          %560 = vmatpush1.bf16.msra.mxu0 %v540
          %561 = vmatprep.subr.bf16.mxu0 0
          %562 = vmatpush1.bf16.msra.mxu0 %v541
          %563 = vmatprep.subr.bf16.mxu0 0
          %564 = vmatpush1.bf16.msra.mxu0 %v542
          %565 = vmatprep.subr.bf16.mxu0 0
          %566 = vmatpush1.bf16.msra.mxu0 %v543
          %567 = vmatprep.subr.bf16.mxu0 0
          %568 = vmatpush1.bf16.msra.mxu0 %v544
          %569 = vmatprep.subr.bf16.mxu0 0
          %570 = vmatpush1.bf16.msra.mxu0 0
          %571 = vmatprep.subr.bf16.mxu0 0
          %572 = vmatpush1.bf16.msra.mxu0 0
          %573 = vmatprep.subr.bf16.mxu0 0
          %574 = vmatpush1.bf16.msra.mxu0 0
          %575 = vmatprep.subr.bf16.mxu0 0
          %576 = vmatpush1.bf16.msra.mxu0 0
          %577 = vmatprep.subr.bf16.mxu0 0
          %578 = vmatpush1.bf16.msra.mxu0 0
          %579 = vmatprep.subr.bf16.mxu0 0
          %580 = vmatpush1.bf16.msra.mxu0 0
          %581 = vmatprep.subr.bf16.mxu0 0
          %582 = vmatpush1.bf16.msra.mxu0 0
          %583 = vmatprep.subr.bf16.mxu0 0
          %584 = vmatpush1.bf16.msra.mxu0 0
          %585 = vmatprep.mubr.bf16.mxu0 0
          %586 = vmatmul.mubr.bf16.gmra.mrb[0].mxu0 %v488
          %v587 = vpop.f32.mrb[0].mxu0
          %v588 = vadd.f32 0.0, %v587
          %v589 = vpop.f32.mrb[0].mxu0
          %v590 = vpop.f32.mrb[0].mxu0
          %v591 = vpop.f32.mrb[0].mxu0
          %592 = vdwg.mxu0
          %s593 = scalar_lea.vmem [#allocation3], %s468
          %594 = vst [vmem:[%s593] sm:$0xff] %v588
          %v595 = vld [vmem:[#allocation6] sm:$0x1]
          %v596 = vrot.slane %v588, 4
          %v597 = vadd.f32 %v588, %v596
          %v598 = vrot.slane %v597, 2
          %v599 = vadd.f32 %v597, %v598
          %v600 = vrot.slane %v599, 1
          %v601 = vadd.f32 %v599, %v600
          %v602 = vadd.f32 %v595, %v601
          %603 = vst [vmem:[#allocation6] sm:$0x1] %v602
          %v604 = vld [vmem:[#allocation7] sm:$0x1]
          %v605 = vmul.f32 %v588, %v588
          %v606 = vrot.slane %v605, 4
          %v607 = vadd.f32 %v605, %v606
          %v608 = vrot.slane %v607, 2
          %v609 = vadd.f32 %v607, %v608
          %v610 = vrot.slane %v609, 1
          %v611 = vadd.f32 %v609, %v610
          %v612 = vadd.f32 %v604, %v611
          %613 = vst [vmem:[#allocation7] sm:$0x1] %v612
        $region72: #{tpu_custom_call.1} parent=47 // pred_fallthru
          _
        %p614 = scmp.eq.s32.totalorder %s29, 2
        // Predicated region
        $region77: #{tpu_custom_call.1} parent=47 // pred_check
          %p615 = pneg %p614
        $region78: #{tpu_custom_call.1} parent=47 // pred_check_branch
          %617 = sbr.rel (%p615) target = $region80
        $region79: #{tpu_custom_call.1} parent=47 // pred_region
          %p618 = scmp.eq.s32.totalorder %s30, 0
          // Predicated region
          $region81: #{tpu_custom_call.1} parent=79 // pred_check
            %p619 = pneg %p618
          $region82: #{tpu_custom_call.1} parent=79 // pred_check_branch
            %621 = sbr.rel (%p619) target = $region84
          $region83: #{tpu_custom_call.1} parent=79 // pred_region
            %v622 = vld [vmem:[#allocation6] sm:$0x1]
            %v623 = vmul.f32 %v622, 0.125
            %v624 = vld [vmem:[#allocation7] sm:$0x1]
            %v625 = vmul.f32 %v624, 0.125
            %v626 = vmul.f32 %v623, %v623
            %v627 = vsub.f32 %v625, %v626
            %v628 = vld [vmem:[%s5] sm:$0x1]
            %v629 = vadd.f32 %v627, 1e-05
            %v630 = vrsqrt.pop %v629
            %v631 = vmul.f32 %v628, %v630
            %632 = vst [vmem:[#allocation6] sm:$0x1] %v631
            %v633 = vld [vmem:[%s6] sm:$0x1]
            %v634 = vmul.f32 %v623, %v631
            %v635 = vsub.f32 %v633, %v634
            %636 = vst [vmem:[#allocation7] sm:$0x1] %v635
          $region84: #{tpu_custom_call.1} parent=79 // pred_fallthru
            _
          %s637 = smul.u32 %s30, 8
          %s638 = scalar_lea.vmem [#allocation3], %s637
          %v639 = vld [vmem:[%s638] sm:$0xff]
          %v640 = vld [vmem:[#allocation6] sm:$0x1]
          %v642 = vlaneseq
          %v643 = vshrl.u32 %v642, 7
          %v644 = vsub.s32 0, %v643
          %v645 = vrot.slane %v640, %v644
          %v647 = vmul.f32 %v639, %v645
          %v648 = vld [vmem:[#allocation7] sm:$0x1]
          %v650 = vlaneseq
          %v651 = vshrl.u32 %v650, 7
          %v652 = vsub.s32 0, %v651
          %v653 = vrot.slane %v648, %v652
          %v655 = vadd.f32 %v647, %v653
          %v656 = vmax.f32 %v655, 0.0
          %657 = vst [vmem:[%s344] sm:$0xff] %v656
        $region80: #{tpu_custom_call.1} parent=47 // pred_fallthru
          _
        %s658 = sand.u32 %s205, 1
        %s659 = scalar_lea.sflag [#allocation10], %s658
        %s660 = sand.u32 %s205, 1
        %s661 = smul.addr %s660, 8
        %s662 = scalar_lea.vmem [#allocation14], %s661
        // Predicated region
        $region85: #{tpu_custom_call.1} parent=47 // pred_check
          %p663 = pneg %p215
        $region86: #{tpu_custom_call.1} parent=47 // pred_check_branch
          %665 = sbr.rel (%p663) target = $region88
        $region87: #{tpu_custom_call.1} parent=47 // pred_region
          %p666 = scmp.eq.s32.totalorder %s29, 2
          %s667 = scalar_select %p666, %s30, 0
          %s669 = ssub.s32 128, 128
          %670 = vsyncadd %s659, %s669
          %s671 = smul.addr %s667, 128
          %s672 = scalar_lea.hbm %s7, %s671
          %s674 = sshll.u32 %s662, 4
          %s675 = int_to_ptr.vmem [resolvable:$true] %s674
          %677 = dma.vmem_to_hbm [thread:$0]  %s675, 128, %s672, %s659
        $region88: #{tpu_custom_call.1} parent=47 // pred_fallthru
          _
      $region48: #{tpu_custom_call.1} parent=5 // pred_fallthru
        _
      %p678 = scmp.le.s32.totalorder 2, %s20
      // Predicated region
      $region89: #{tpu_custom_call.1} parent=5 // pred_check
        %p679 = pneg %p678
      $region90: #{tpu_custom_call.1} parent=5 // pred_check_branch
        %681 = sbr.rel (%p679) target = $region92
      $region91: #{tpu_custom_call.1} parent=5 // pred_region
        %s682 = ssub.s32 %s20, 2
        // Predicated region
        $region93: #{tpu_custom_call.1} parent=91 // pred_check
          %p683 = pneg %p221
        $region94: #{tpu_custom_call.1} parent=91 // pred_check_branch
          %685 = sbr.rel (%p683) target = $region96
        $region95: #{tpu_custom_call.1} parent=91 // pred_region
          %s686 = sand.u32 %s206, 1
          %s687 = scalar_lea.sflag [#allocation10], %s686
          %s688 = sand.u32 %s206, 1
          %s689 = smul.addr %s688, 8
          %s690 = scalar_lea.vmem [#allocation14], %s689
          %691 = dma.done %s687, 128
        $region96: #{tpu_custom_call.1} parent=91 // pred_fallthru
          _
      $region92: #{tpu_custom_call.1} parent=5 // pred_fallthru
        _
    $region6: #{tpu_custom_call.1} parent=1 // loop_footer
      %s24 = sadd.s32 1, %s20
    $region7: #{tpu_custom_call.1} parent=1 // loop_footer_branch
      %19 = sbr.rel target = $region3
    $region8: #{tpu_custom_call.1} parent=1 // loop_exit
      _
    %692 = vsyncpa [#allocation9], 1
    %s693 = scalar_lea.sflag [#allocation9], 1
    %694 = vsyncpa %s693, 1
    %695 = vsyncpa [#allocation12], 1
    %696 = vsyncpa [#allocation10], 1
    %s697 = scalar_lea.sflag [#allocation10], 1
    %698 = vsyncpa %s697, 1

</llo_original>
